<compile_context>
chip_gen: v5e
topology: v5e:2x2
jax: 0.10.0
libtpu: 0.0.40
codegen_flags: <defaults>
</compile_context>

<pallas_src>
import functools

import jax
import jax.numpy as jnp
from jax import lax
from jax.experimental import pallas as pl
from jax.experimental.pallas import tpu as pltpu

# Finite "minus infinity" sentinel: avoids inf-inf / inf*0 NaNs in masking
# and in the online-LSE rescaling.
_NEG_BIG = -1e30


# ----------------------------------------------------------------------------
# Kernel A: full-C block, one grid axis over batch tiles.
#   row_loss = sum((m - x) * t) + log(sum(exp(x - m))) * sum(t)
# ----------------------------------------------------------------------------
def _soft_ce_row_kernel(x_ref, t_ref, out_ref, *, batch, mask_rows):
    x = x_ref[...].astype(jnp.float32)
    t = t_ref[...].astype(jnp.float32)

    if mask_rows:
        # Last batch tile is partial: out-of-range rows hold undefined data
        # (possibly Inf/NaN) -> force x=0, t=0 so they contribute exactly 0.
        i = pl.program_id(0)
        blk_b, blk_c = x.shape
        row = i * blk_b + lax.broadcasted_iota(jnp.int32, (blk_b, blk_c), 0)
        valid = row < batch
        x = jnp.where(valid, x, 0.0)
        t = jnp.where(valid, t, 0.0)

    m = jnp.max(x, axis=-1, keepdims=True)
    s = jnp.sum(jnp.exp(x - m), axis=-1, keepdims=True)
    sum_t = jnp.sum(t, axis=-1, keepdims=True)
    a = jnp.sum((m - x) * t, axis=-1, keepdims=True)
    out_ref[...] = a + jnp.log(s) * sum_t


# ----------------------------------------------------------------------------
# Kernel B: class-chunked online-LSE (for very large C).
#   grid = (batch tiles [parallel], class chunks [arbitrary])
#   scratch: running max m, running exp-sum s, running sum((m - x)*t) a,
#            running sum(t); loss finalized on the last class chunk.
# ----------------------------------------------------------------------------
def _soft_ce_chunked_kernel(x_ref, t_ref, out_ref,
                            m_ref, s_ref, a_ref, tsum_ref,
                            *, batch, classes, mask_rows, mask_cols):
    i = pl.program_id(0)
    j = pl.program_id(1)

    @pl.when(j == 0)
    def _init():
        m_ref[...] = jnp.full(m_ref.shape, _NEG_BIG, jnp.float32)
        s_ref[...] = jnp.zeros(s_ref.shape, jnp.float32)
        a_ref[...] = jnp.zeros(a_ref.shape, jnp.float32)
        tsum_ref[...] = jnp.zeros(tsum_ref.shape, jnp.float32)

    x = x_ref[...].astype(jnp.float32)
    t = t_ref[...].astype(jnp.float32)
    blk_b, blk_c = x.shape

    if mask_rows or mask_cols:
        valid = None
        if mask_rows:
            row = i * blk_b + lax.broadcasted_iota(jnp.int32, (blk_b, blk_c), 0)
            valid = row < batch
        if mask_cols:
            col = j * blk_c + lax.broadcasted_iota(jnp.int32, (blk_b, blk_c), 1)
            cvalid = col < classes
            valid = cvalid if valid is None else (valid & cvalid)
        # masked entries: x -> very negative (no effect on max / exp-sum),
        # t -> 0 (no effect on sum_t / a). Everything stays finite.
        x = jnp.where(valid, x, _NEG_BIG)
        t = jnp.where(valid, t, 0.0)

    m_old = m_ref[...]
    m_new = jnp.maximum(m_old, jnp.max(x, axis=-1, keepdims=True))
    s_ref[...] = (s_ref[...] * jnp.exp(m_old - m_new)
                  + jnp.sum(jnp.exp(x - m_new), axis=-1, keepdims=True))
    a_ref[...] = (a_ref[...] + (m_new - m_old) * tsum_ref[...]
                  + jnp.sum((m_new - x) * t, axis=-1, keepdims=True))
    tsum_ref[...] = tsum_ref[...] + jnp.sum(t, axis=-1, keepdims=True)
    m_ref[...] = m_new

    @pl.when(j == pl.num_programs(1) - 1)
    def _finalize():
        out_ref[...] = a_ref[...] + jnp.log(s_ref[...]) * tsum_ref[...]


# ----------------------------------------------------------------------------
# Wrapper
# ----------------------------------------------------------------------------
def _tpu_vmem_bytes():
    """Physical per-TensorCore VMEM; 128 MiB fallback if the query fails."""
    try:
        return int(pltpu.get_tpu_info().vmem_capacity_bytes)
    except Exception:
        return 128 * 1024 * 1024


def soft_cross_entropy(inputs, target, reduction="mean", *,
                       block_b=None, block_c=None):
    """Pallas implementation of SoftCrossEntropy.forward for 2-D (B, C) inputs."""
    B, C = inputs.shape
    assert target.shape == (B, C)
    if reduction not in ("mean", "none"):
        raise ValueError(f"unsupported reduction: {reduction!r}")

    dtype_bytes = jnp.dtype(inputs.dtype).itemsize
    vmem_phys = _tpu_vmem_bytes()
    # v7x-like chip: 64 MiB VMEM per TC, ~3.2 TB/s HBM, 2 TensorCores.
    small_vmem = vmem_phys <= 64 * 1024 * 1024
    vmem_budget = min(48 * 1024 * 1024, int(0.75 * vmem_phys))
    vmem_limit = min(vmem_phys - 8 * 1024 * 1024, 64 * 1024 * 1024)
    # Per-input tile byte target: larger on v7x so the ~0.35 us per-step
    # overhead stays small relative to the (faster) HBM stream.
    target_tile_bytes = (4 if small_vmem else 2) * 1024 * 1024

    # Per-batch-row VMEM cost of a full-C block:
    #   2 inputs * 2 pipeline buffers * C * dtype_bytes  (BlockSpec DMAs)
    # + ~4 f32 temporaries * C * 4                        (upcasts, exp, products)
    per_row_full_c = C * (4 * dtype_bytes + 16)
    use_chunked = (block_c is not None) or (8 * per_row_full_c > vmem_budget)

    if use_chunked:
        if block_c is None:
            block_c = min(2048, -(-C // 128) * 128)
        c_eff = block_c
    else:
        c_eff = C

    if block_b is None:
        per_row = c_eff * (4 * dtype_bytes + 16)
        rows = min(vmem_budget // per_row,
                   max(target_tile_bytes // (dtype_bytes * c_eff), 8),
                   2048)
        rows = max(8, (rows // 8) * 8)
        b_pad8 = -(-B // 8) * 8
        rows = min(rows, b_pad8)
        if small_vmem and b_pad8 >= 16:
            # 2 TensorCores per chip: guarantee >= 2 batch grid steps.
            rows = min(rows, max(8, ((b_pad8 // 2) // 8) * 8))
        block_b = max(rows, 8)
    assert block_b % 8 == 0 and block_b >= 8

    nb = pl.cdiv(B, block_b)
    out_rows = nb * block_b                 # never an OOB output block
    mask_rows = (B % block_b) != 0

    if not use_chunked:
        kernel = functools.partial(_soft_ce_row_kernel,
                                   batch=B, mask_rows=mask_rows)
        row_loss = pl.pallas_call(
            kernel,
            out_shape=jax.ShapeDtypeStruct((out_rows, 1), jnp.float32),
            grid_spec=pltpu.PrefetchScalarGridSpec(
                num_scalar_prefetch=0,
                grid=(nb,),
                in_specs=[
                    pl.BlockSpec((block_b, C), lambda i: (i, 0)),
                    pl.BlockSpec((block_b, C), lambda i: (i, 0)),
                ],
                out_specs=pl.BlockSpec((block_b, 1), lambda i: (i, 0)),
            ),
            compiler_params=pltpu.CompilerParams(
                dimension_semantics=("parallel",),
                vmem_limit_bytes=vmem_limit,
            ),
        )(inputs, target)
    else:
        nc = pl.cdiv(C, block_c)
        mask_cols = (C % block_c) != 0
        kernel = functools.partial(_soft_ce_chunked_kernel,
                                   batch=B, classes=C,
                                   mask_rows=mask_rows, mask_cols=mask_cols)
        row_loss = pl.pallas_call(
            kernel,
            out_shape=jax.ShapeDtypeStruct((out_rows, 1), jnp.float32),
            grid_spec=pltpu.PrefetchScalarGridSpec(
                num_scalar_prefetch=0,
                grid=(nb, nc),
                in_specs=[
                    pl.BlockSpec((block_b, block_c), lambda i, j: (i, j)),
                    pl.BlockSpec((block_b, block_c), lambda i, j: (i, j)),
                ],
                out_specs=pl.BlockSpec((block_b, 1), lambda i, j: (i, 0)),
                scratch_shapes=[pltpu.VMEM((block_b, 1), jnp.float32)] * 4,
            ),
            compiler_params=pltpu.CompilerParams(
                dimension_semantics=("parallel", "arbitrary"),
                vmem_limit_bytes=vmem_limit,
            ),
        )(inputs, target)

    if reduction == "mean":
        # masked / padded rows are exactly 0 -> safe to sum everything
        return jnp.sum(row_loss) / jnp.float32(B)
    return row_loss[:B, 0]


# Pure-JAX reference for correctness checking.
def _soft_cross_entropy_ref(inputs, target, reduction="mean"):
    log_sm = jax.nn.log_softmax(inputs.astype(jnp.float32), axis=1)
    nll = -log_sm
    t = target.astype(jnp.float32)
    if reduction == "mean":
        return jnp.sum(nll * t) / inputs.shape[0]
    return jnp.sum(nll * t, axis=-1)


if __name__ == "__main__":
    key = jax.random.PRNGKey(0)
    k1, k2, k3, k4, k5, k6 = jax.random.split(key, 6)

    # --- case 1: small f32, lane-aligned, exact tiling ----------------------
    B, C = 8, 128
    logits = jax.random.normal(k1, (B, C), dtype=jnp.float32)
    target = jax.nn.softmax(jax.random.normal(k2, (B, C), dtype=jnp.float32), axis=1)

    loss_mean = jax.block_until_ready(soft_cross_entropy(logits, target, "mean"))
    loss_none = jax.block_until_ready(soft_cross_entropy(logits, target, "none"))
    ref_mean = _soft_cross_entropy_ref(logits, target, "mean")
    ref_none = _soft_cross_entropy_ref(logits, target, "none")
    assert jnp.allclose(loss_mean, ref_mean, rtol=1e-5, atol=1e-5), (loss_mean, ref_mean)
    assert jnp.allclose(loss_none, ref_none, rtol=1e-5, atol=1e-5)

    # --- case 2: bf16 inputs, ragged batch (exercises in-kernel row mask) ---
    B2, C2 = 10, 256
    logits2 = jax.random.normal(k3, (B2, C2), dtype=jnp.bfloat16)
    target2 = jax.nn.softmax(
        jax.random.normal(k4, (B2, C2), dtype=jnp.float32), axis=1
    ).astype(jnp.bfloat16)

    loss_mean2 = jax.block_until_ready(soft_cross_entropy(logits2, target2, "mean"))
    loss_none2 = jax.block_until_ready(soft_cross_entropy(logits2, target2, "none"))
    ref_mean2 = _soft_cross_entropy_ref(logits2, target2, "mean")
    ref_none2 = _soft_cross_entropy_ref(logits2, target2, "none")
    assert jnp.allclose(loss_mean2, ref_mean2, rtol=2e-5, atol=2e-5), (loss_mean2, ref_mean2)
    assert jnp.allclose(loss_none2, ref_none2, rtol=2e-5, atol=2e-5)

    # --- case 3: forced class-chunked online-LSE path (ragged B and C) ------
    B3, C3 = 12, 320
    logits3 = jax.random.normal(k5, (B3, C3), dtype=jnp.float32)
    target3 = jax.nn.softmax(jax.random.normal(k6, (B3, C3), dtype=jnp.float32), axis=1)

    loss_mean3 = jax.block_until_ready(
        soft_cross_entropy(logits3, target3, "mean", block_b=8, block_c=128))
    loss_none3 = jax.block_until_ready(
        soft_cross_entropy(logits3, target3, "none", block_b=8, block_c=128))
    ref_mean3 = _soft_cross_entropy_ref(logits3, target3, "mean")
    ref_none3 = _soft_cross_entropy_ref(logits3, target3, "none")
    assert jnp.allclose(loss_mean3, ref_mean3, rtol=1e-4, atol=1e-4), (loss_mean3, ref_mean3)
    assert jnp.allclose(loss_none3, ref_none3, rtol=1e-4, atol=1e-4)

    print("KERNEL_OK")
</pallas_src>

<mosaic_0001>
module attributes {stable_mosaic.version = 11 : i64} {
  func.func @_soft_ce_row_kernel(%arg0: i32, %arg1: memref<8x128xf32, #tpu.memory_space<vmem>>, %arg2: memref<8x128xf32, #tpu.memory_space<vmem>>, %arg3: memref<8x1xf32, #tpu.memory_space<vmem>>) attributes {dimension_semantics = [#tpu.dimension_semantics<parallel>], iteration_bounds = array<i64: 1>, scalar_prefetch = 0 : i64, scratch_operands = 0 : i64, tpu.core_type = #tpu.core_type<tc>, window_params = [{transform_indices = @transform_0, window_bounds = array<i64: 8, 128>}, {transform_indices = @transform_1, window_bounds = array<i64: 8, 128>}, {transform_indices = @transform_2, window_bounds = array<i64: 8, 1>}]} {
    %c0 = arith.constant 0 : index
    %c0_0 = arith.constant 0 : index
    %0 = vector.load %arg1[%c0, %c0_0] : memref<8x128xf32, #tpu.memory_space<vmem>>, vector<8x128xf32>
    %c0_1 = arith.constant 0 : index
    %c0_2 = arith.constant 0 : index
    %1 = vector.load %arg2[%c0_1, %c0_2] : memref<8x128xf32, #tpu.memory_space<vmem>>, vector<8x128xf32>
    %cst = arith.constant dense<0xFF800000> : vector<8xf32>
    %2 = vector.multi_reduction <maximumf>, %0, %cst [1] : vector<8x128xf32> to vector<8xf32>
    %3 = vector.shape_cast %2 : vector<8xf32> to vector<8x1xf32>
    %4 = vector.broadcast %3 : vector<8x1xf32> to vector<8x128xf32>
    %5 = arith.subf %0, %4 : vector<8x128xf32>
    %6 = math.exp %5 : vector<8x128xf32>
    %cst_3 = arith.constant dense<0.000000e+00> : vector<8xf32>
    %7 = vector.multi_reduction <add>, %6, %cst_3 [1] : vector<8x128xf32> to vector<8xf32>
    %8 = vector.shape_cast %7 : vector<8xf32> to vector<8x1xf32>
    %cst_4 = arith.constant dense<0.000000e+00> : vector<8xf32>
    %9 = vector.multi_reduction <add>, %1, %cst_4 [1] : vector<8x128xf32> to vector<8xf32>
    %10 = vector.shape_cast %9 : vector<8xf32> to vector<8x1xf32>
    %11 = vector.broadcast %3 : vector<8x1xf32> to vector<8x128xf32>
    %12 = arith.subf %11, %0 : vector<8x128xf32>
    %13 = arith.mulf %12, %1 : vector<8x128xf32>
    %cst_5 = arith.constant dense<0.000000e+00> : vector<8xf32>
    %14 = vector.multi_reduction <add>, %13, %cst_5 [1] : vector<8x128xf32> to vector<8xf32>
    %15 = vector.shape_cast %14 : vector<8xf32> to vector<8x1xf32>
    %16 = math.log %8 : vector<8x1xf32>
    %17 = arith.mulf %16, %10 : vector<8x1xf32>
    %18 = arith.addf %15, %17 : vector<8x1xf32>
    %c0_6 = arith.constant 0 : index
    %c0_7 = arith.constant 0 : index
    %19 = vector.load %arg3[%c0_6, %c0_7] : memref<8x1xf32, #tpu.memory_space<vmem>>, vector<8x1xf32>
    tpu.vector_store %arg3[%c0_6, %c0_7], %18 {strides = array<i32>} : memref<8x1xf32, #tpu.memory_space<vmem>>, vector<8x1xf32>,
    return
  }
  func.func @transform_0(%arg0: i32) -> (i32, i32) {
    %c0_i32 = arith.constant 0 : i32
    %c0_i32_0 = arith.constant 0 : i32
    return %arg0, %c0_i32 : i32, i32
  }
  func.func @transform_1(%arg0: i32) -> (i32, i32) {
    %c0_i32 = arith.constant 0 : i32
    %c0_i32_0 = arith.constant 0 : i32
    return %arg0, %c0_i32 : i32, i32
  }
  func.func @transform_2(%arg0: i32) -> (i32, i32) {
    %c0_i32 = arith.constant 0 : i32
    %c0_i32_0 = arith.constant 0 : i32
    return %arg0, %c0_i32 : i32, i32
  }
}

</mosaic_0001>

<llo_original>
// kernel: tpu_custom_call.1
$region0: #{tpu_custom_call.1}
  #allocation0 [shape = 'u32[]', space=smem, size = 0x4, offset = 0x4, fixed_abs, tag = 'smem constant byte address 0x4 - core index']
  #allocation1 [shape = 'u32[72,128]{1,0:T(1,128)}', space=vmem, size = 0x9000, scoped, tag = 'internal scratch']
  %s0 = inlined_call_operand.hbm [shape: f32[8,128], index: 0, kind: input, shape index: {}]
  %s1 = inlined_call_operand.hbm [shape: f32[8,128], index: 1, kind: input, shape index: {}]
  %s2 = inlined_call_operand.vmem [shape: f32[8,1], index: 2, kind: output, shape index: {}]
  %s3 = sld [smem:[#allocation0]]
  $region26: #{tpu_custom_call.1} parent=0
    _
  %s5 = ssub.s32 1, %s3
  %s6 = scalar_select 0, %s5, %s3
  $region1: #{tpu_custom_call.1} parent=0
    #allocation2 [shape = 'u8[4096]{0}', space=vmem, size = 0x1000, scoped, tag = 'input window, operand 0, single buffered']
    #allocation3 [shape = 's32[1]{0}', space=sflag, size = 0x4, scoped, tag = 'scoped memory for tpu_custom_call.1']
    #allocation4 [shape = 'u8[4096]{0}', space=vmem, size = 0x1000, scoped, tag = 'input window, operand 1, single buffered']
    #allocation5 [shape = 's32[1]{0}', space=sflag, size = 0x4, scoped, tag = 'scoped memory for tpu_custom_call.1']
    %7 = vsyncpa [#allocation3], 0
    %8 = vsyncpa [#allocation5], 0
    // Predicated region
    $region2: #{tpu_custom_call.1} parent=1 // pred_check
      _
    $region3: #{tpu_custom_call.1} parent=1 // pred_check_branch
      %10 = sbr.rel (0) target = $region5
    $region4: #{tpu_custom_call.1} parent=1 // pred_region
      %12 = vsyncadd [#allocation3], 0
      %s14 = sshll.u32 %s0, 4
      %s15 = int_to_ptr.hbm [resolvable:$true] %s14
      %s16 = sshll.u32 [#allocation2], 4
      %s17 = int_to_ptr.vmem [resolvable:$true] %s16
      %19 = dma.hbm_to_vmem [thread:$0]  %s15, 128, %s17, [#allocation3]
    $region5: #{tpu_custom_call.1} parent=1 // pred_fallthru
      _
    // Predicated region
    $region6: #{tpu_custom_call.1} parent=1 // pred_check
      _
    $region7: #{tpu_custom_call.1} parent=1 // pred_check_branch
      %21 = sbr.rel (0) target = $region9
    $region8: #{tpu_custom_call.1} parent=1 // pred_region
      %23 = vsyncadd [#allocation5], 0
      %s25 = sshll.u32 %s1, 4
      %s26 = int_to_ptr.hbm [resolvable:$true] %s25
      %s27 = sshll.u32 [#allocation4], 4
      %s28 = int_to_ptr.vmem [resolvable:$true] %s27
      %30 = dma.hbm_to_vmem [thread:$0]  %s26, 128, %s28, [#allocation5]
    $region9: #{tpu_custom_call.1} parent=1 // pred_fallthru
      _
    // Predicated region
    $region10: #{tpu_custom_call.1} parent=1 // pred_check
      _
    $region11: #{tpu_custom_call.1} parent=1 // pred_check_branch
      %32 = sbr.rel (0) target = $region13
    $region12: #{tpu_custom_call.1} parent=1 // pred_region
      %34 = dma.done [#allocation3], 128
    $region13: #{tpu_custom_call.1} parent=1 // pred_fallthru
      _
    // Predicated region
    $region14: #{tpu_custom_call.1} parent=1 // pred_check
      _
    $region15: #{tpu_custom_call.1} parent=1 // pred_check_branch
      %36 = sbr.rel (0) target = $region17
    $region16: #{tpu_custom_call.1} parent=1 // pred_region
      %38 = dma.done [#allocation5], 128
    $region17: #{tpu_custom_call.1} parent=1 // pred_fallthru
      _
    %v39 = vld [vmem:[#allocation2] sm:$0xff]
    %v40 = vld [vmem:[#allocation4] sm:$0xff]
    %41 = vmax.xlane.f32.xlu0 %v39
    %v42 = vpop.xlane.xlu0 %41
    %v43 = vsub.f32 %v39, %v42
    %v44 = vmul.f32 %v43, 1.442695
    %v45 = vpow.pop %v44
    %46 = vadd.xlane.f32.xlu0 %v45
    %v47 = vpop.xlane.xlu0 %46
    %48 = vadd.xlane.f32.xlu0 %v40
    %v49 = vpop.xlane.xlu0 %48
    %v50 = vsub.f32 %v42, %v39
    %v51 = vmul.f32 %v50, %v40
    %52 = vadd.xlane.f32.xlu0 %v51
    %v53 = vpop.xlane.xlu0 %52
    %v54 = vlog2.pop %v47
    %v55 = vmul.f32 %v54, 0.6931472
    %v56 = vmul.f32 %v55, %v49
    %v57 = vadd.f32 %v53, %v56
    %vm58 = vcmask 7168
    %59 = vst.msk [vmem:[%s2] sm:$0xff] %vm58, %v57
    // Predicated region
    $region18: #{tpu_custom_call.1} parent=1 // pred_check
      _
    $region19: #{tpu_custom_call.1} parent=1 // pred_check_branch
      %61 = sbr.rel (0) target = $region21
    $region20: #{tpu_custom_call.1} parent=1 // pred_region
      _
    $region21: #{tpu_custom_call.1} parent=1 // pred_fallthru
      _
    // Predicated region
    $region22: #{tpu_custom_call.1} parent=1 // pred_check
      _
    $region23: #{tpu_custom_call.1} parent=1 // pred_check_branch
      %63 = sbr.rel (0) target = $region25
    $region24: #{tpu_custom_call.1} parent=1 // pred_region
      _
    $region25: #{tpu_custom_call.1} parent=1 // pred_fallthru
      _
    %64 = vsyncpa [#allocation3], 1
    %65 = vsyncpa [#allocation5], 1

</llo_original>
